<compile_context>
chip_gen: v7x
topology: tpu7x:2x2x1
jax: 0.10.0
libtpu: 0.0.40
codegen_flags: <defaults>
</compile_context>

<pallas_src>
import jax
import jax.numpy as jnp
from jax.experimental import pallas as pl
from jax.experimental.pallas import tpu as pltpu


def _vitup_kernel(x_ref, w_ref, b_ref, o_ref):
    # x_ref: (C, T_HW)  w_ref: (OC, C)  b_ref: (OC, 1) f32  o_ref: (OC, T_HW)
    acc = jnp.dot(w_ref[...], x_ref[...],
                  preferred_element_type=jnp.float32)        # MXU, f32 acc
    o_ref[...] = (acc + b_ref[...]).astype(o_ref.dtype)       # VPU epilogue


def _round_up(x, m):
    return ((x + m - 1) // m) * m


def _pick_tile_hw(C, OC, HW, N, in_dsize, out_dsize, vmem_budget):
    """Largest 128-multiple HW tile that fits the VMEM budget, then shrunk
    (never below 128) so the grid has enough steps for pipelining / 2 TCs."""
    # Resident VMEM: double-buffered x block + double-buffered out block,
    # plus the (double-buffered) constant weight and lane-padded bias blocks.
    fixed = 2 * OC * C * in_dsize + 2 * OC * 128 * 4
    per_lane = 2 * C * in_dsize + 2 * OC * out_dsize
    max_t = max((vmem_budget - fixed) // per_lane, 128)
    t = max(128, (max_t // 128) * 128)
    t = min(t, 2048)                       # diminishing returns past ~1024 lanes
    t = min(t, _round_up(HW, 128))         # never wider than the (padded) row
    # Guarantee >= 4 grid steps when HW allows it (v7x megacore + DMA overlap).
    target_steps = 4
    if N * pl.cdiv(HW, t) < target_steps and HW > 128:
        per_n = pl.cdiv(target_steps, N)
        t = max(128, _round_up(pl.cdiv(HW, per_n), 128))
    return t


def vitup_forward(x_levels, weights, biases, *, compute_dtype=None,
                  out_dtype=None):
    """x_levels: (4, N, C, H, W); weights: (4, OC, C); biases: (4, OC).

    Reproduces VITUp.forward's return value: fpn1(x[0]) as NCHW.
    Levels 1-3 are computed-then-discarded in the PyTorch module, so they
    are skipped here (no observable difference in the returned value).
    """
    x0 = x_levels[0]                      # (N, C, H, W)
    w0 = weights[0]                       # (OC, C)
    b0 = biases[0]                        # (OC,)

    N, C, H, W = x0.shape
    OC = w0.shape[0]
    HW = H * W

    if out_dtype is None:
        out_dtype = x0.dtype
    if compute_dtype is None:
        # HBM-bound op: feed bf16 to halve input bytes; accumulate in f32.
        compute_dtype = jnp.bfloat16 if x0.dtype == jnp.float32 else x0.dtype

    # Free reshape: stay NCHW, flatten spatial onto the lane axis.
    x_flat = x0.reshape(N, C, HW).astype(compute_dtype)        # (N, C, HW)
    w = w0.astype(compute_dtype)                               # (OC, C)
    b_col = b0.reshape(OC, 1).astype(jnp.float32)              # f32 epilogue add

    in_dsize = jnp.dtype(compute_dtype).itemsize
    out_dsize = jnp.dtype(out_dtype).itemsize

    # VMEM budget: query the chip (v5e/v6e: 128 MiB, v7x: 64 MiB per TC),
    # keep ~25% headroom for Mosaic internal scratch.
    try:
        vmem_cap = pltpu.get_tpu_info().vmem_capacity_bytes
    except Exception:
        vmem_cap = 64 * 1024 * 1024       # conservative (v7x per-TC size)
    vmem_budget = int(vmem_cap * 0.75)

    t_hw = _pick_tile_hw(C, OC, HW, N, in_dsize, out_dsize, vmem_budget)
    grid = (N, pl.cdiv(HW, t_hw))         # cdiv: partial last block handled

    # TODO(synk): if C grows so large that the (C, t_hw) block no longer fits
    # the VMEM budget, add a K(=C) reduction axis as the LAST grid axis marked
    # "arbitrary", with an f32 VMEM accumulator initialized/finalized via
    # pl.when(k == 0 / k == last).

    cost = pl.CostEstimate(
        flops=2 * N * OC * C * HW,
        transcendentals=0,
        bytes_accessed=(N * C * HW * in_dsize + OC * C * in_dsize
                        + OC * 4 + N * OC * HW * out_dsize),
    )

    out = pl.pallas_call(
        _vitup_kernel,
        out_shape=jax.ShapeDtypeStruct((N, OC, HW), out_dtype),
        grid_spec=pltpu.PrefetchScalarGridSpec(
            num_scalar_prefetch=0,
            grid=grid,
            in_specs=[
                pl.BlockSpec((pl.Squeezed(), C, t_hw), lambda n, j: (n, 0, j)),
                pl.BlockSpec((OC, C), lambda n, j: (0, 0)),
                pl.BlockSpec((OC, 1), lambda n, j: (0, 0)),
            ],
            out_specs=pl.BlockSpec((pl.Squeezed(), OC, t_hw),
                                   lambda n, j: (n, 0, j)),
        ),
        compiler_params=pltpu.CompilerParams(
            dimension_semantics=("parallel", "parallel"),
            vmem_limit_bytes=vmem_budget),
        cost_estimate=cost,
    )(x_flat, w, b_col)

    return out.reshape(N, OC, H, W)       # already NCHW -- no transpose needed


def reference_forward_f32(x_levels, weights, biases):
    # plain-JAX f32 reference: 1x1 conv == einsum over channel dim
    feat0 = jnp.einsum("nchw,oc->nohw", x_levels[0], weights[0],
                       preferred_element_type=jnp.float32)
    return feat0 + biases[0][None, :, None, None]


def reference_forward_bf16(x_levels, weights, biases):
    # reference matching the kernel's bf16-input / f32-accumulate numerics
    feat0 = jnp.einsum("nchw,oc->nohw",
                       x_levels[0].astype(jnp.bfloat16),
                       weights[0].astype(jnp.bfloat16),
                       preferred_element_type=jnp.float32)
    return feat0 + biases[0][None, :, None, None]


if __name__ == "__main__":
    key = jax.random.PRNGKey(0)
    L = 4
    N, C, H, W = 2, 32, 16, 16       # batch=2, embed_dim=32, spatial=16
    OC = 64                          # out_channel

    k1, k2, k3 = jax.random.split(key, 3)
    x_levels = jax.random.normal(k1, (L, N, C, H, W), dtype=jnp.float32)
    # deterministic synthetic parameters (4 conv layers, kernel_size=1)
    weights = jax.random.normal(k2, (L, OC, C), dtype=jnp.float32) * 0.05
    biases = jax.random.normal(k3, (L, OC), dtype=jnp.float32) * 0.05

    out = vitup_forward(x_levels, weights, biases)
    out = jax.block_until_ready(out)

    assert out.shape == (N, OC, H, W)
    assert out.dtype == x_levels.dtype

    # Tight check against a reference with the same bf16-input numerics.
    ref_bf16 = reference_forward_bf16(x_levels, weights, biases)
    assert jnp.allclose(out, ref_bf16.astype(out.dtype), atol=2e-3, rtol=2e-3)

    # Module-semantics check against the full-f32 reference (loose tolerance
    # covers the deliberate bf16 input cast of this HBM-bound kernel).
    ref_f32 = reference_forward_f32(x_levels, weights, biases)
    assert jnp.allclose(out, ref_f32, atol=2e-2, rtol=2e-2)

    print("KERNEL_OK")
</pallas_src>

<mosaic_0001>
module attributes {stable_mosaic.version = 11 : i64} {
  func.func @_vitup_kernel(%arg0: i32, %arg1: i32, %arg2: memref<1x32x128xbf16, #tpu.memory_space<vmem>>, %arg3: memref<64x32xbf16, #tpu.memory_space<vmem>>, %arg4: memref<64x1xf32, #tpu.memory_space<vmem>>, %arg5: memref<1x64x128xf32, #tpu.memory_space<vmem>>) attributes {dimension_semantics = [#tpu.dimension_semantics<parallel>, #tpu.dimension_semantics<parallel>], iteration_bounds = array<i64: 2, 2>, scalar_prefetch = 0 : i64, scratch_operands = 0 : i64, tpu.core_type = #tpu.core_type<tc>, window_params = [{transform_indices = @transform_0, window_bounds = array<i64: 1, 32, 128>}, {pipeline_mode = #tpu.pipeline_mode<synchronous>, transform_indices = @transform_1, window_bounds = array<i64: 64, 32>}, {pipeline_mode = #tpu.pipeline_mode<synchronous>, transform_indices = @transform_2, window_bounds = array<i64: 64, 1>}, {transform_indices = @transform_3, window_bounds = array<i64: 1, 64, 128>}]} {
    %c0 = arith.constant 0 : index
    %c0_0 = arith.constant 0 : index
    %0 = vector.load %arg3[%c0, %c0_0] : memref<64x32xbf16, #tpu.memory_space<vmem>>, vector<64x32xbf16>
    %c0_1 = arith.constant 0 : index
    %c0_2 = arith.constant 0 : index
    %c0_3 = arith.constant 0 : index
    %1 = vector.load %arg2[%c0_1, %c0_2, %c0_3] : memref<1x32x128xbf16, #tpu.memory_space<vmem>>, vector<1x32x128xbf16>
    %2 = vector.shape_cast %1 : vector<1x32x128xbf16> to vector<32x128xbf16>
    %cst = arith.constant dense<0.000000e+00> : vector<64x128xf32>
    %3 = tpu.matmul %0, %2, %cst {dimension_numbers = #tpu.dot_dimension_numbers<[1], [0], [0], [1], [0, 0, 1, 1], [], []>} : vector<64x32xbf16>, vector<32x128xbf16>, vector<64x128xf32> -> vector<64x128xf32>
    %c0_4 = arith.constant 0 : index
    %c0_5 = arith.constant 0 : index
    %4 = vector.load %arg4[%c0_4, %c0_5] : memref<64x1xf32, #tpu.memory_space<vmem>>, vector<64x1xf32>
    %5 = vector.broadcast %4 : vector<64x1xf32> to vector<64x128xf32>
    %6 = arith.addf %3, %5 : vector<64x128xf32>
    %c0_6 = arith.constant 0 : index
    %c0_7 = arith.constant 0 : index
    %c0_8 = arith.constant 0 : index
    %7 = vector.load %arg5[%c0_6, %c0_7, %c0_8] : memref<1x64x128xf32, #tpu.memory_space<vmem>>, vector<1x64x128xf32>
    %8 = vector.shape_cast %7 : vector<1x64x128xf32> to vector<64x128xf32>
    %9 = vector.shape_cast %6 : vector<64x128xf32> to vector<1x64x128xf32>
    tpu.vector_store %arg5[%c0_6, %c0_7, %c0_8], %9 {strides = array<i32>} : memref<1x64x128xf32, #tpu.memory_space<vmem>>, vector<1x64x128xf32>,
    return
  }
  func.func @transform_0(%arg0: i32, %arg1: i32) -> (i32, i32, i32) {
    %c0_i32 = arith.constant 0 : i32
    %c0_i32_0 = arith.constant 0 : i32
    return %arg0, %c0_i32, %arg1 : i32, i32, i32
  }
  func.func @transform_1(%arg0: i32, %arg1: i32) -> (i32, i32) {
    %c0_i32 = arith.constant 0 : i32
    %c0_i32_0 = arith.constant 0 : i32
    %c0_i32_1 = arith.constant 0 : i32
    return %c0_i32, %c0_i32_0 : i32, i32
  }
  func.func @transform_2(%arg0: i32, %arg1: i32) -> (i32, i32) {
    %c0_i32 = arith.constant 0 : i32
    %c0_i32_0 = arith.constant 0 : i32
    %c0_i32_1 = arith.constant 0 : i32
    return %c0_i32, %c0_i32_0 : i32, i32
  }
  func.func @transform_3(%arg0: i32, %arg1: i32) -> (i32, i32, i32) {
    %c0_i32 = arith.constant 0 : i32
    %c0_i32_0 = arith.constant 0 : i32
    return %arg0, %c0_i32, %arg1 : i32, i32, i32
  }
}

</mosaic_0001>

<llo_original>
// kernel: tpu_custom_call.1
$region0: #{tpu_custom_call.1}
  #allocation0 [shape = 'u32[]', space=smem, size = 0x4, offset = 0x4, fixed_abs, tag = 'smem constant byte address 0x4 - core index']
  #allocation1 [shape = 'u32[144,128]{1,0:T(1,128)}', space=vmem, size = 0x12000, scoped, tag = 'internal scratch']
  %s0 = inlined_call_operand.vmem [shape: bf16[2,32,256], index: 0, kind: input, shape index: {}]
  %s1 = inlined_call_operand.vmem [shape: bf16[64,32], index: 1, kind: input, shape index: {}]
  %s2 = inlined_call_operand.vmem [shape: f32[64,1], index: 2, kind: input, shape index: {}]
  %s3 = inlined_call_operand.hbm [shape: f32[2,64,256], index: 3, kind: output, shape index: {}]
  %s4 = sld [smem:[#allocation0]]
  $region86: #{tpu_custom_call.1} parent=0
    _
  %s6 = ssub.s32 1, %s4
  %s7 = scalar_select 0, %s6, %s4
  $region1: #{tpu_custom_call.1} parent=0
    #allocation2 [shape = 'u8[16384]{0}', space=vmem, size = 0x4000, scoped, tag = 'input window, operand 0']
    #allocation3 [shape = 'u8[65536]{0}', space=vmem, size = 0x10000, scoped, tag = 'output window, operand 0']
    #allocation4 [shape = 's32[2]{0}', space=sflag, size = 0x8, scoped, tag = 'scoped memory for tpu_custom_call.1']
    %8 = vsyncpa [#allocation4], 0
    %s9 = scalar_lea.sflag [#allocation4], 1
    %10 = vsyncpa %s9, 0
    loop: start=0, step=1, limit=6
    $region2: #{tpu_custom_call.1} parent=1 // loop_pre_header
      _
    $region3: #{tpu_custom_call.1} parent=1 // loop_header
      %s12 = sphi 0, %s16
      %p13 = scmp.ge.s32.totalorder %s12, 6
      %s19 = sphi 0, %s31
      %s20 = sphi 0, %s27
      %s21 = sphi 0, %s19
      %s22 = sphi 0, %s20
      %s23 = sphi 0, %s21
      %s24 = sphi 0, %s22
      %s36 = sphi 0, %s38
      %s39 = sphi 0, %s36
      %s40 = sphi 0, %s39
      %s56 = sphi 0, %s40
      %s60 = sphi 0, %s60
      %s62 = sphi 0, %s60
      %s63 = sphi 0, %s62
      %s77 = sphi 0, %s63
      %s81 = sphi 0, %s81
      %s83 = sphi 0, %s81
      %s84 = sphi 0, %s83
      %s98 = sphi 0, %s84
      %s106 = sphi 0, %s108
      %s109 = sphi 0, %s106
      %s110 = sphi 0, %s109
      %s126 = sphi 0, %s110
    $region4: #{tpu_custom_call.1} parent=1 // loop_header_branch
      %15 = sbr.rel (%p13) target = $region8
    $region5: #{tpu_custom_call.1} parent=1 // loop_body
      %s17 = ssub.s32 %s12, 1
      %s18 = ssub.s32 %s12, 2
      %s25 = sadd.s32 1, %s20
      %p26 = scmp.ge.s32.totalorder %s25, 2
      %s27 = scalar_select %p26, 0, %s25
      %s28 = sadd.s32 1, %s19
      %s29 = scalar_select %p26, %s28, %s19
      %p30 = scmp.ge.s32.totalorder %s29, 2
      %s31 = scalar_select %p30, 0, %s29
      %s32 = ssub.s32 %s19, %s31
      %s33 = ssub.s32 %s20, %s27
      %s34 = sor.u32 %s32, %s33
      %p35 = scmp.eq.s32.totalorder %s34, 0
      %s37 = sadd.s32 %s36, 1
      %s38 = scalar_select %p35, %s36, %s37
      %p41 = pneg %p35
      %p42 = scmp.eq.s32.totalorder %s12, 3
      %p43 = por %p41, %p42
      %p44 = scmp.ne.s32.totalorder %s36, %s39
      %p45 = scmp.eq.s32.totalorder %s12, 0
      %p46 = por %p44, %p45
      %p47 = scmp.ne.s32.totalorder %s36, %s39
      %p48 = scmp.eq.s32.totalorder %s17, 3
      %p49 = por %p47, %p48
      %p50 = scmp.ne.s32.totalorder %s39, %s40
      %p51 = scmp.eq.s32.totalorder %s17, 0
      %p52 = por %p50, %p51
      %p53 = scmp.ne.s32.totalorder %s39, %s40
      %p54 = scmp.eq.s32.totalorder %s18, 3
      %p55 = por %p53, %p54
      %p57 = scmp.ne.s32.totalorder %s40, %s56
      %p58 = scmp.eq.s32.totalorder %s18, 0
      %p59 = por %p57, %p58
      %s61 = sadd.s32 %s60, 1
      %p64 = scmp.eq.s32.totalorder %s12, 3
      %p65 = scmp.ne.s32.totalorder %s60, %s62
      %p66 = scmp.eq.s32.totalorder %s12, 0
      %p67 = por %p65, %p66
      %p68 = scmp.ne.s32.totalorder %s60, %s62
      %p69 = scmp.eq.s32.totalorder %s17, 3
      %p70 = por %p68, %p69
      %p71 = scmp.ne.s32.totalorder %s62, %s63
      %p72 = scmp.eq.s32.totalorder %s17, 0
      %p73 = por %p71, %p72
      %p74 = scmp.ne.s32.totalorder %s62, %s63
      %p75 = scmp.eq.s32.totalorder %s18, 3
      %p76 = por %p74, %p75
      %p78 = scmp.ne.s32.totalorder %s63, %s77
      %p79 = scmp.eq.s32.totalorder %s18, 0
      %p80 = por %p78, %p79
      %s82 = sadd.s32 %s81, 1
      %p85 = scmp.eq.s32.totalorder %s12, 3
      %p86 = scmp.ne.s32.totalorder %s81, %s83
      %p87 = scmp.eq.s32.totalorder %s12, 0
      %p88 = por %p86, %p87
      %p89 = scmp.ne.s32.totalorder %s81, %s83
      %p90 = scmp.eq.s32.totalorder %s17, 3
      %p91 = por %p89, %p90
      %p92 = scmp.ne.s32.totalorder %s83, %s84
      %p93 = scmp.eq.s32.totalorder %s17, 0
      %p94 = por %p92, %p93
      %p95 = scmp.ne.s32.totalorder %s83, %s84
      %p96 = scmp.eq.s32.totalorder %s18, 3
      %p97 = por %p95, %p96
      %p99 = scmp.ne.s32.totalorder %s84, %s98
      %p100 = scmp.eq.s32.totalorder %s18, 0
      %p101 = por %p99, %p100
      %s102 = ssub.s32 %s19, %s31
      %s103 = ssub.s32 %s20, %s27
      %s104 = sor.u32 %s102, %s103
      %p105 = scmp.eq.s32.totalorder %s104, 0
      %s107 = sadd.s32 %s106, 1
      %s108 = scalar_select %p105, %s106, %s107
      %p111 = pneg %p105
      %p112 = scmp.eq.s32.totalorder %s12, 3
      %p113 = por %p111, %p112
      %p114 = scmp.ne.s32.totalorder %s106, %s109
      %p115 = scmp.eq.s32.totalorder %s12, 0
      %p116 = por %p114, %p115
      %p117 = scmp.ne.s32.totalorder %s106, %s109
      %p118 = scmp.eq.s32.totalorder %s17, 3
      %p119 = por %p117, %p118
      %p120 = scmp.ne.s32.totalorder %s109, %s110
      %p121 = scmp.eq.s32.totalorder %s17, 0
      %p122 = por %p120, %p121
      %p123 = scmp.ne.s32.totalorder %s109, %s110
      %p124 = scmp.eq.s32.totalorder %s18, 3
      %p125 = por %p123, %p124
      %p127 = scmp.ne.s32.totalorder %s110, %s126
      %p128 = scmp.eq.s32.totalorder %s18, 0
      %p129 = por %p127, %p128
      %p130 = scmp.le.s32.totalorder 1, %s12
      %p131 = scmp.lt.s32.totalorder %s12, 5
      %p132 = pnand %p130, %p131
      %p133 = pneg %p132
      // Predicated region
      $region9: #{tpu_custom_call.1} parent=5 // pred_check
        _
      $region10: #{tpu_custom_call.1} parent=5 // pred_check_branch
        %135 = sbr.rel (%p132) target = $region12
      $region11: #{tpu_custom_call.1} parent=5 // pred_region
        %s136 = ssub.s32 %s12, 1
        // Predicated region
        $region13: #{tpu_custom_call.1} parent=11 // pred_check
          %p137 = pneg %p73
        $region14: #{tpu_custom_call.1} parent=11 // pred_check_branch
          %139 = sbr.rel (%p137) target = $region16
        $region15: #{tpu_custom_call.1} parent=11 // pred_region
          _
        $region16: #{tpu_custom_call.1} parent=11 // pred_fallthru
          _
        // Predicated region
        $region17: #{tpu_custom_call.1} parent=11 // pred_check
          %p140 = pneg %p94
        $region18: #{tpu_custom_call.1} parent=11 // pred_check_branch
          %142 = sbr.rel (%p140) target = $region20
        $region19: #{tpu_custom_call.1} parent=11 // pred_region
          _
        $region20: #{tpu_custom_call.1} parent=11 // pred_fallthru
          _
      $region12: #{tpu_custom_call.1} parent=5 // pred_fallthru
        _
      %p143 = scmp.lt.s32.totalorder %s12, 4
      // Predicated region
      $region21: #{tpu_custom_call.1} parent=5 // pred_check
        %p144 = pneg %p143
      $region22: #{tpu_custom_call.1} parent=5 // pred_check_branch
        %146 = sbr.rel (%p144) target = $region24
      $region23: #{tpu_custom_call.1} parent=5 // pred_region
        // Predicated region
        $region25: #{tpu_custom_call.1} parent=23 // pred_check
          %p147 = pneg %p46
        $region26: #{tpu_custom_call.1} parent=23 // pred_check_branch
          %149 = sbr.rel (%p147) target = $region28
        $region27: #{tpu_custom_call.1} parent=23 // pred_region
          %s150 = sand.u32 %s36, 1
          %s151 = sand.u32 %s36, 1
          %s152 = smul.addr %s151, 16
          %s153 = scalar_lea.vmem [#allocation2], %s152
          %s154 = smul.addr %s19, 8
          %s155 = sadd.s32 %s20, %s154
          %s156 = smul.addr %s155, 4
          %s157 = scalar_lea.vmem %s0, %s156
          // Predicated region
          $region29: #{tpu_custom_call.1} parent=27 // pred_check
            _
          $region30: #{tpu_custom_call.1} parent=27 // pred_check_branch
            %159 = sbr.rel (0) target = $region32
          $region31: #{tpu_custom_call.1} parent=27 // pred_region
            // Predicated region
            $region33: #{tpu_custom_call.1} parent=31 // pred_check
              _
            $region34: #{tpu_custom_call.1} parent=31 // pred_check_branch
              %161 = sbr.rel target = $region36
            $region35: #{tpu_custom_call.1} parent=31 // pred_region
              // Predicated region
              $region48: #{tpu_custom_call.1} parent=35 // pred_check
                _
              $region49: #{tpu_custom_call.1} parent=35 // pred_check_branch
                %182 = sbr.rel (0) target = $region51
              $region50: #{tpu_custom_call.1} parent=35 // pred_region
                loop: start=0, step=1, limit=1
                $region52: #{tpu_custom_call.1} parent=50 // loop_pre_header
                  _
                $region53: #{tpu_custom_call.1} parent=50 // loop_header
                  %s184 = sphi 0, %s188
                  %p185 = scmp.ge.s32.totalorder %s184, 1
                  %s189 = sphi %s157, %s157
                  %s190 = sphi %s153, %s153
                $region54: #{tpu_custom_call.1} parent=50 // loop_header_branch
                  %187 = sbr.rel (%p185) target = $region58
                $region55: #{tpu_custom_call.1} parent=50 // loop_body
                  _
                $region56: #{tpu_custom_call.1} parent=50 // loop_footer
                  %s188 = sadd.s32 1, %s184
                $region57: #{tpu_custom_call.1} parent=50 // loop_footer_branch
                  %183 = sbr.rel target = $region53
                $region58: #{tpu_custom_call.1} parent=50 // loop_exit
                  _
                loop: start=0, step=1, limit=1
                $region59: #{tpu_custom_call.1} parent=50 // loop_pre_header
                  _
                $region60: #{tpu_custom_call.1} parent=50 // loop_header
                  %s193 = sphi 0, %s197
                  %p194 = scmp.ge.s32.totalorder %s193, 1
                  %s198 = sphi %s157, %s157
                  %s199 = sphi %s153, %s153
                $region61: #{tpu_custom_call.1} parent=50 // loop_header_branch
                  %196 = sbr.rel (%p194) target = $region65
                $region62: #{tpu_custom_call.1} parent=50 // loop_body
                  %v200 = vld [vmem:[%s198] sm:$0xf]
                  %201 = vst [vmem:[%s199] sm:$0xf] %v200
                  %v202 = vld [vmem:[%s198 + $0x8] sm:$0xf]
                  %203 = vst [vmem:[%s199 + $0x4] sm:$0xf] %v202
                  %v204 = vld [vmem:[%s198 + $0x10] sm:$0xf]
                  %205 = vst [vmem:[%s199 + $0x8] sm:$0xf] %v204
                  %v206 = vld [vmem:[%s198 + $0x18] sm:$0xf]
                  %207 = vst [vmem:[%s199 + $0xc] sm:$0xf] %v206
                $region63: #{tpu_custom_call.1} parent=50 // loop_footer
                  %s197 = sadd.s32 1, %s193
                $region64: #{tpu_custom_call.1} parent=50 // loop_footer_branch
                  %192 = sbr.rel target = $region60
                $region65: #{tpu_custom_call.1} parent=50 // loop_exit
                  _
              $region51: #{tpu_custom_call.1} parent=35 // pred_fallthru
                _
            $region36: #{tpu_custom_call.1} parent=31 // pred_fallthru
              _
            // Predicated region
            $region37: #{tpu_custom_call.1} parent=31 // pred_check
              _
            $region38: #{tpu_custom_call.1} parent=31 // pred_check_branch
              %163 = sbr.rel (0) target = $region40
            $region39: #{tpu_custom_call.1} parent=31 // pred_region
              loop: start=0, step=1, limit=1
              $region41: #{tpu_custom_call.1} parent=39 // loop_pre_header
                _
              $region42: #{tpu_custom_call.1} parent=39 // loop_header
                %s166 = sphi 0, %s170
                %p167 = scmp.ge.s32.totalorder %s166, 1
                %s171 = sphi %s157, %s157
                %s172 = sphi %s153, %s153
              $region43: #{tpu_custom_call.1} parent=39 // loop_header_branch
                %169 = sbr.rel (%p167) target = $region47
              $region44: #{tpu_custom_call.1} parent=39 // loop_body
                %v173 = vld [vmem:[%s171] sm:$0xf]
                %174 = vst [vmem:[%s172] sm:$0xf] %v173
                %v175 = vld [vmem:[%s171 + $0x8] sm:$0xf]
                %176 = vst [vmem:[%s172 + $0x4] sm:$0xf] %v175
                %v177 = vld [vmem:[%s171 + $0x10] sm:$0xf]
                %178 = vst [vmem:[%s172 + $0x8] sm:$0xf] %v177
                %v179 = vld [vmem:[%s171 + $0x18] sm:$0xf]
                %180 = vst [vmem:[%s172 + $0xc] sm:$0xf] %v179
              $region45: #{tpu_custom_call.1} parent=39 // loop_footer
                %s170 = sadd.s32 1, %s166
              $region46: #{tpu_custom_call.1} parent=39 // loop_footer_branch
                %165 = sbr.rel target = $region42
              $region47: #{tpu_custom_call.1} parent=39 // loop_exit
                _
            $region40: #{tpu_custom_call.1} parent=31 // pred_fallthru
              _
          $region32: #{tpu_custom_call.1} parent=27 // pred_fallthru
            _
          %208 = vnop
        $region28: #{tpu_custom_call.1} parent=23 // pred_fallthru
          _
      $region24: #{tpu_custom_call.1} parent=5 // pred_fallthru
        _
      %p209 = scmp.le.s32.totalorder 1, %s12
      %p210 = scmp.lt.s32.totalorder %s12, 5
      %p211 = pnand %p209, %p210
      %p212 = pneg %p211
      // Predicated region
      $region66: #{tpu_custom_call.1} parent=5 // pred_check
        _
      $region67: #{tpu_custom_call.1} parent=5 // pred_check_branch
        %214 = sbr.rel (%p211) target = $region69
      $region68: #{tpu_custom_call.1} parent=5 // pred_region
        %s215 = ssub.s32 %s12, 1
        %s216 = sand.u32 %s39, 1
        %s217 = sand.u32 %s39, 1
        %s218 = smul.addr %s217, 16
        %s219 = scalar_lea.vmem [#allocation2], %s218
        // Predicated region
        $region70: #{tpu_custom_call.1} parent=68 // pred_check
          %p220 = pneg %p52
        $region71: #{tpu_custom_call.1} parent=68 // pred_check_branch
          %222 = sbr.rel (%p220) target = $region73
        $region72: #{tpu_custom_call.1} parent=68 // pred_region
          _
        $region73: #{tpu_custom_call.1} parent=68 // pred_fallthru
          _
        %s223 = sand.u32 %s39, 1
        %s224 = sand.u32 %s39, 1
        %s225 = smul.addr %s224, 16
        %s226 = scalar_lea.vmem [#allocation2], %s225
        %p227 = pneg %p52
        %p228 = pneg %p49
        %p229 = pneg %p73
        %p230 = pneg %p70
        %p231 = pneg %p94
        %p232 = pneg %p91
        %p233 = pneg %p122
        %p234 = pneg %p119
        %s235 = sand.u32 %s109, 1
        %s236 = scalar_lea.sflag [#allocation4], %s235
        %s237 = sand.u32 %s109, 1
        %s238 = smul.addr %s237, 64
        %s239 = scalar_lea.vmem [#allocation3], %s238
        %v241 = vld [vmem:[%s1] sm:$0xf]
        %v242 = vld [vmem:[%s1 + $0x4] sm:$0xf]
        %v243 = vld [vmem:[%s1 + $0x8] sm:$0xf]
        %v244 = vld [vmem:[%s1 + $0xc] sm:$0xf]
        %v245 = vld [vmem:[%s1 + $0x10] sm:$0xf]
        %v246 = vld [vmem:[%s1 + $0x14] sm:$0xf]
        %v247 = vld [vmem:[%s1 + $0x18] sm:$0xf]
        %v248 = vld [vmem:[%s1 + $0x1c] sm:$0xf]
        %v249 = vld [vmem:[%s219] sm:$0xf]
        %v250 = vld [vmem:[%s219 + $0x4] sm:$0xf]
        %v251 = vld [vmem:[%s219 + $0x8] sm:$0xf]
        %v252 = vld [vmem:[%s219 + $0xc] sm:$0xf]
        %v253 = vld [vmem:[%s2] sm:$0xff]
        %v254 = vld [vmem:[%s2 + $0x8] sm:$0xff]
        %v255 = vld [vmem:[%s2 + $0x10] sm:$0xff]
        %v256 = vld [vmem:[%s2 + $0x18] sm:$0xff]
        %v257 = vld [vmem:[%s2 + $0x20] sm:$0xff]
        %v258 = vld [vmem:[%s2 + $0x28] sm:$0xff]
        %v259 = vld [vmem:[%s2 + $0x30] sm:$0xff]
        %v260 = vld [vmem:[%s2 + $0x38] sm:$0xff]
        %262 = vset.pattern.permute.xlu0 0
        %263 = vperm.xlu0 %262, %v253
        %v264 = vpop.permute.xlu0 %263
        %267 = vset.pattern.permute.xlu0 0
        %268 = vperm.xlu0 %267, %v254
        %v269 = vpop.permute.xlu0 %268
        %272 = vset.pattern.permute.xlu0 0
        %273 = vperm.xlu0 %272, %v255
        %v274 = vpop.permute.xlu0 %273
        %277 = vset.pattern.permute.xlu0 0
        %278 = vperm.xlu0 %277, %v256
        %v279 = vpop.permute.xlu0 %278
        %282 = vset.pattern.permute.xlu0 0
        %283 = vperm.xlu0 %282, %v257
        %v284 = vpop.permute.xlu0 %283
        %287 = vset.pattern.permute.xlu0 0
        %288 = vperm.xlu0 %287, %v258
        %v289 = vpop.permute.xlu0 %288
        %292 = vset.pattern.permute.xlu0 0
        %293 = vperm.xlu0 %292, %v259
        %v294 = vpop.permute.xlu0 %293
        %297 = vset.pattern.permute.xlu0 0
        %298 = vperm.xlu0 %297, %v260
        %v299 = vpop.permute.xlu0 %298
        %v309 = vunpack.c.l.b16 %v241
        %v310 = vunpack.c.l.b16 %v242
        %v311 = vunpack.c.l.b16 %v243
        %v312 = vunpack.c.l.b16 %v244
        %v313 = vunpack.c.l.b16 %v245
        %v314 = vunpack.c.l.b16 %v246
        %v315 = vunpack.c.l.b16 %v247
        %v316 = vunpack.c.l.b16 %v248
        %v317 = vpack.c.b16 %v310, %v309
        %v318 = vpack.c.b16 %v312, %v311
        %v319 = vpack.c.b16 %v314, %v313
        %v320 = vpack.c.b16 %v316, %v315
        %v325 = vunpack.c.l.b16 %v249
        %v326 = vunpack.c.l.b16 %v250
        %v327 = vunpack.c.l.b16 %v251
        %v328 = vunpack.c.l.b16 %v252
        %v329 = vpack.c.b16 %v326, %v325
        %v330 = vpack.c.b16 %v328, %v327
        %vm333 = vcmask 261120
        %v335 = vsel %vm333, %v317, 0
        %v338 = vsel %vm333, %v318, 0
        %v341 = vsel %vm333, %v319, 0
        %v344 = vsel %vm333, %v320, 0
        %346 = vmatprep.subr.bf16.mxu0 0
        %347 = vmatpush1.bf16.msra.mxu0 %v329
        %348 = vmatprep.subr.bf16.mxu0 0
        %349 = vmatpush1.bf16.msra.mxu0 %v330
        %350 = vmatprep.subr.bf16.mxu0 0
        %351 = vmatpush1.bf16.msra.mxu0 0
        %352 = vmatprep.subr.bf16.mxu0 0
        %353 = vmatpush1.bf16.msra.mxu0 0
        %354 = vmatprep.subr.bf16.mxu0 0
        %355 = vmatpush1.bf16.msra.mxu0 0
        %356 = vmatprep.subr.bf16.mxu0 0
        %357 = vmatpush1.bf16.msra.mxu0 0
        %358 = vmatprep.subr.bf16.mxu0 0
        %359 = vmatpush1.bf16.msra.mxu0 0
        %360 = vmatprep.subr.bf16.mxu0 0
        %361 = vmatpush1.bf16.msra.mxu0 0
        %362 = vmatprep.subr.bf16.mxu0 0
        %363 = vmatpush1.bf16.msra.mxu0 0
        %364 = vmatprep.subr.bf16.mxu0 0
        %365 = vmatpush1.bf16.msra.mxu0 0
        %366 = vmatprep.subr.bf16.mxu0 0
        %367 = vmatpush1.bf16.msra.mxu0 0
        %368 = vmatprep.subr.bf16.mxu0 0
        %369 = vmatpush1.bf16.msra.mxu0 0
        %370 = vmatprep.subr.bf16.mxu0 0
        %371 = vmatpush1.bf16.msra.mxu0 0
        %372 = vmatprep.subr.bf16.mxu0 0
        %373 = vmatpush1.bf16.msra.mxu0 0
        %374 = vmatprep.subr.bf16.mxu0 0
        %375 = vmatpush1.bf16.msra.mxu0 0
        %376 = vmatprep.subr.bf16.mxu0 0
        %377 = vmatpush1.bf16.msra.mxu0 0
        %378 = vmatprep.mubr.bf16.mxu0 0
        %379 = vmatmul.mubr.bf16.gmra.mrb[0].mxu0 %v335
        %v380 = vpop.f32.mrb[0].mxu0
        %v381 = vadd.f32 %v264, %v380
        %v382 = vpop.f32.mrb[0].mxu0
        %v383 = vpop.f32.mrb[0].mxu0
        %v384 = vadd.f32 %v269, %v383
        %v385 = vpop.f32.mrb[0].mxu0
        %386 = vmatprep.mubr.bf16.mxu0 0
        %387 = vmatmul.mubr.bf16.gmra.mrb[0].mxu0 %v338
        %v388 = vpop.f32.mrb[0].mxu0
        %v389 = vadd.f32 %v274, %v388
        %v390 = vpop.f32.mrb[0].mxu0
        %v391 = vpop.f32.mrb[0].mxu0
        %v392 = vadd.f32 %v279, %v391
        %v393 = vpop.f32.mrb[0].mxu0
        %394 = vmatprep.mubr.bf16.mxu0 0
        %395 = vmatmul.mubr.bf16.gmra.mrb[0].mxu0 %v341
        %v396 = vpop.f32.mrb[0].mxu0
        %v397 = vadd.f32 %v284, %v396
        %v398 = vpop.f32.mrb[0].mxu0
        %v399 = vpop.f32.mrb[0].mxu0
        %v400 = vadd.f32 %v289, %v399
        %v401 = vpop.f32.mrb[0].mxu0
        %402 = vmatprep.mubr.bf16.mxu0 0
        %403 = vmatmul.mubr.bf16.gmra.mrb[0].mxu0 %v344
        %v404 = vpop.f32.mrb[0].mxu0
        %v405 = vadd.f32 %v294, %v404
        %v406 = vpop.f32.mrb[0].mxu0
        %v407 = vpop.f32.mrb[0].mxu0
        %v408 = vadd.f32 %v299, %v407
        %v409 = vpop.f32.mrb[0].mxu0
        %410 = vdwg.mxu0
        %411 = vst [vmem:[%s239] sm:$0xff] %v381
        %412 = vst [vmem:[%s239 + $0x8] sm:$0xff] %v384
        %413 = vst [vmem:[%s239 + $0x10] sm:$0xff] %v389
        %414 = vst [vmem:[%s239 + $0x18] sm:$0xff] %v392
        %415 = vst [vmem:[%s239 + $0x20] sm:$0xff] %v397
        %416 = vst [vmem:[%s239 + $0x28] sm:$0xff] %v400
        %417 = vst [vmem:[%s239 + $0x30] sm:$0xff] %v405
        %418 = vst [vmem:[%s239 + $0x38] sm:$0xff] %v408
        %s419 = sand.u32 %s109, 1
        %s420 = scalar_lea.sflag [#allocation4], %s419
        %s421 = sand.u32 %s109, 1
        %s422 = smul.addr %s421, 64
        %s423 = scalar_lea.vmem [#allocation3], %s422
        // Predicated region
        $region74: #{tpu_custom_call.1} parent=68 // pred_check
          %p424 = pneg %p119
        $region75: #{tpu_custom_call.1} parent=68 // pred_check_branch
          %426 = sbr.rel (%p424) target = $region77
        $region76: #{tpu_custom_call.1} parent=68 // pred_region
          %s428 = ssub.s32 1024, 1024
          %429 = vsyncadd %s420, %s428
          %s430 = smul.addr %s21, 16
          %s431 = sadd.s32 %s22, %s430
          %s432 = smul.addr %s431, 128
          %s433 = scalar_lea.hbm %s3, %s432
          %s434 = sshll.u32 %s423, 4
          %s435 = int_to_ptr.vmem [resolvable:$true] %s434
          %440 = dma.vmem_to_hbm [thread:$0]  %s435, 1024, %s433, %s420, 128, 256, 8
        $region77: #{tpu_custom_call.1} parent=68 // pred_fallthru
          _
      $region69: #{tpu_custom_call.1} parent=5 // pred_fallthru
        _
      %p441 = scmp.le.s32.totalorder 2, %s12
      // Predicated region
      $region78: #{tpu_custom_call.1} parent=5 // pred_check
        %p442 = pneg %p441
      $region79: #{tpu_custom_call.1} parent=5 // pred_check_branch
        %444 = sbr.rel (%p442) target = $region81
      $region80: #{tpu_custom_call.1} parent=5 // pred_region
        %s445 = ssub.s32 %s12, 2
        // Predicated region
        $region82: #{tpu_custom_call.1} parent=80 // pred_check
          %p446 = pneg %p125
        $region83: #{tpu_custom_call.1} parent=80 // pred_check_branch
          %448 = sbr.rel (%p446) target = $region85
        $region84: #{tpu_custom_call.1} parent=80 // pred_region
          %s449 = sand.u32 %s110, 1
          %s450 = scalar_lea.sflag [#allocation4], %s449
          %s451 = sand.u32 %s110, 1
          %s452 = smul.addr %s451, 64
          %s453 = scalar_lea.vmem [#allocation3], %s452
          %454 = dma.done %s450, 1024
        $region85: #{tpu_custom_call.1} parent=80 // pred_fallthru
          _
      $region81: #{tpu_custom_call.1} parent=5 // pred_fallthru
        _
    $region6: #{tpu_custom_call.1} parent=1 // loop_footer
      %s16 = sadd.s32 1, %s12
    $region7: #{tpu_custom_call.1} parent=1 // loop_footer_branch
      %11 = sbr.rel target = $region3
    $region8: #{tpu_custom_call.1} parent=1 // loop_exit
      _
    %455 = vsyncpa [#allocation4], 1
    %s456 = scalar_lea.sflag [#allocation4], 1
    %457 = vsyncpa %s456, 1

</llo_original>
